<compile_context>
chip_gen: v5e
topology: v5e:2x2
jax: 0.10.0
libtpu: 0.0.40
codegen_flags: <defaults>
</compile_context>

<pallas_src>
import math
import jax
import jax.numpy as jnp
from jax.experimental import pallas as pl
from jax.experimental.pallas import tpu as pltpu


def _round_up(n, m):
    return ((n + m - 1) // m) * m


def mlp_kernel(x_ref, w1_ref, b1_ref, w2_ref, b2_ref, w3_ref, b3_ref, o_ref):
    # x arrives in its native dtype (f32); cast to the MXU compute dtype here
    # (VPU work under MXU slack) instead of a separate XLA pass in the wrapper.
    x = x_ref[...].astype(w1_ref.dtype)
    # Layer 1: MXU matmul, f32 accumulation, bias added in f32, ReLU.
    h = jnp.dot(x, w1_ref[...], preferred_element_type=jnp.float32)
    h = jnp.maximum(h + b1_ref[...], 0.0).astype(w2_ref.dtype)
    # Layer 2.
    h = jnp.dot(h, w2_ref[...], preferred_element_type=jnp.float32)
    h = jnp.maximum(h + b2_ref[...], 0.0).astype(w3_ref.dtype)
    # Output layer (no activation). Stored at the true output width; the handful
    # of masked vst's per step are far cheaper than 128-lane f32 padding + slice.
    out = jnp.dot(h, w3_ref[...], preferred_element_type=jnp.float32) + b3_ref[...]
    o_ref[...] = out.astype(o_ref.dtype)


def pack_params(params, compute_dtype=jnp.bfloat16):
    """One-time conversion of f32 params into kernel operand dtypes.

    Call at init / after parameter updates — NOT per forward call — so the
    per-call path touches only x and the output.
    """
    return {
        "w1": params["w1"].astype(compute_dtype),
        "w2": params["w2"].astype(compute_dtype),
        "w3": params["w3"].astype(compute_dtype),
        "b1": params["b1"].astype(jnp.float32),
        "b2": params["b2"].astype(jnp.float32),
        "b3": params["b3"].astype(jnp.float32),
    }


def _choose_batch_tile(B, max_tb=512):
    # Single grid step whenever the whole batch fits one tile: per-step fixed
    # cost (~0.35 us) dominates at this problem size on single-TC chips.
    if B <= max_tb:
        return B  # block == full array extent -> always a legal block shape
    # Larger batches: even number of steps (maps 1:1 onto v7x's 2 TCs), tile a
    # multiple of 16 (bf16 sublane pack) so batch-dim loads stay unmasked.
    steps = pl.cdiv(B, max_tb)
    steps += steps % 2
    return _round_up(pl.cdiv(B, steps), 16)


def fully_connected_forward(x, packed, *, max_tb=512):
    """x: [B, input_dim] in its native dtype. packed: output of pack_params()."""
    B, in_dim = x.shape
    w1, b1, w2, b2, w3, b3 = (packed["w1"], packed["b1"], packed["w2"],
                              packed["b2"], packed["w3"], packed["b3"])
    out_dim = w3.shape[1]

    tb = _choose_batch_tile(B, max_tb)
    grid = (pl.cdiv(B, tb),)

    # Constant block index -> fetched once, VMEM-resident across grid steps.
    full = lambda arr: pl.BlockSpec(arr.shape, lambda i: (0, 0))

    return pl.pallas_call(
        mlp_kernel,
        out_shape=jax.ShapeDtypeStruct((B, out_dim), x.dtype),
        grid_spec=pltpu.PrefetchScalarGridSpec(
            num_scalar_prefetch=0,
            grid=grid,
            in_specs=[
                pl.BlockSpec((tb, in_dim), lambda i: (i, 0)),
                full(w1), full(b1),
                full(w2), full(b2),
                full(w3), full(b3),
            ],
            out_specs=pl.BlockSpec((tb, out_dim), lambda i: (i, 0)),
        ),
        compiler_params=pltpu.CompilerParams(
            dimension_semantics=("parallel",)),
    )(x, w1, b1, w2, b2, w3, b3)


def init_params(key, input_dim, output_dim, hidden_sizes):
    """Deterministic init mimicking nn.Linear defaults + xavier_uniform(gain=0.01) last fc."""
    params = {}
    dims = [input_dim] + hidden_sizes
    keys = jax.random.split(key, 2 * len(hidden_sizes) + 1)
    ki = 0
    for li, (d_in, d_out) in enumerate(zip(dims[:-1], dims[1:]), start=1):
        bound = 1.0 / math.sqrt(d_in)
        w = jax.random.uniform(keys[ki], (d_in, d_out), jnp.float32, -bound, bound); ki += 1
        b = jax.random.uniform(keys[ki], (1, d_out), jnp.float32, -bound, bound); ki += 1
        params[f"w{li}"] = w
        params[f"b{li}"] = b
    d_in = dims[-1]
    gain = 0.01
    a = gain * math.sqrt(6.0 / (d_in + output_dim))
    w_last = jax.random.uniform(keys[ki], (d_in, output_dim), jnp.float32, -a, a)
    params[f"w{len(hidden_sizes) + 1}"] = w_last
    params[f"b{len(hidden_sizes) + 1}"] = jnp.zeros((1, output_dim), jnp.float32)
    return params


def reference_forward_f32(x, p):
    h = jnp.maximum(x @ p["w1"] + p["b1"], 0.0)
    h = jnp.maximum(h @ p["w2"] + p["b2"], 0.0)
    return h @ p["w3"] + p["b3"]


def reference_forward_bf16(x, p):
    # Same bf16 quantization of operands/intermediates as the kernel, f32 accumulation.
    q = lambda a: a.astype(jnp.bfloat16).astype(jnp.float32)
    h = jnp.maximum(q(x) @ q(p["w1"]) + p["b1"], 0.0)
    h = jnp.maximum(q(h) @ q(p["w2"]) + p["b2"], 0.0)
    return q(h) @ q(p["w3"]) + p["b3"]


# TODO(synk): is_LN (LayerNorm), is_SN (spectral_norm) and orthogonal_init branches
# of the PyTorch module are not implemented; defaults (False) are covered.

if __name__ == "__main__":
    # Module config: arch='256-256' (default). batch=256 -> single grid step.
    input_dim, output_dim = 32, 8
    hidden_sizes = [256, 256]
    batch = 256

    key = jax.random.PRNGKey(0)
    k_params, k_x = jax.random.split(key)
    params = init_params(k_params, input_dim, output_dim, hidden_sizes)
    packed = pack_params(params)  # one-time; not in the per-call path
    x = jax.random.normal(k_x, (batch, input_dim), jnp.float32)

    out = fully_connected_forward(x, packed)
    out = jax.block_until_ready(out)
    assert out.shape == (batch, output_dim)

    # Exact-path check (same bf16 quantization, f32 accumulation).
    ref_q = reference_forward_bf16(x, params)
    assert jnp.allclose(out, ref_q, atol=5e-3, rtol=5e-3)
    # Sanity check against the full-f32 reference (loose tol due to bf16 operands).
    ref_f = reference_forward_f32(x, params)
    assert jnp.allclose(out, ref_f, atol=3e-2, rtol=3e-2)

    print("KERNEL_OK")
</pallas_src>

<mosaic_0001>
module attributes {stable_mosaic.version = 11 : i64} {
  func.func @mlp_kernel(%arg0: i32, %arg1: memref<256x32xf32, #tpu.memory_space<vmem>>, %arg2: memref<32x256xbf16, #tpu.memory_space<vmem>>, %arg3: memref<1x256xf32, #tpu.memory_space<vmem>>, %arg4: memref<256x256xbf16, #tpu.memory_space<vmem>>, %arg5: memref<1x256xf32, #tpu.memory_space<vmem>>, %arg6: memref<256x8xbf16, #tpu.memory_space<vmem>>, %arg7: memref<1x8xf32, #tpu.memory_space<vmem>>, %arg8: memref<256x8xf32, #tpu.memory_space<vmem>>) attributes {dimension_semantics = [#tpu.dimension_semantics<parallel>], iteration_bounds = array<i64: 1>, scalar_prefetch = 0 : i64, scratch_operands = 0 : i64, tpu.core_type = #tpu.core_type<tc>, window_params = [{transform_indices = @transform_0, window_bounds = array<i64: 256, 32>}, {pipeline_mode = #tpu.pipeline_mode<synchronous>, transform_indices = @transform_1, window_bounds = array<i64: 32, 256>}, {pipeline_mode = #tpu.pipeline_mode<synchronous>, transform_indices = @transform_2, window_bounds = array<i64: 1, 256>}, {pipeline_mode = #tpu.pipeline_mode<synchronous>, transform_indices = @transform_3, window_bounds = array<i64: 256, 256>}, {pipeline_mode = #tpu.pipeline_mode<synchronous>, transform_indices = @transform_4, window_bounds = array<i64: 1, 256>}, {pipeline_mode = #tpu.pipeline_mode<synchronous>, transform_indices = @transform_5, window_bounds = array<i64: 256, 8>}, {pipeline_mode = #tpu.pipeline_mode<synchronous>, transform_indices = @transform_6, window_bounds = array<i64: 1, 8>}, {transform_indices = @transform_7, window_bounds = array<i64: 256, 8>}]} {
    %c0 = arith.constant 0 : index
    %c0_0 = arith.constant 0 : index
    %0 = vector.load %arg1[%c0, %c0_0] : memref<256x32xf32, #tpu.memory_space<vmem>>, vector<256x32xf32>
    %1 = arith.truncf %0 : vector<256x32xf32> to vector<256x32xbf16>
    %c0_1 = arith.constant 0 : index
    %c0_2 = arith.constant 0 : index
    %2 = vector.load %arg2[%c0_1, %c0_2] : memref<32x256xbf16, #tpu.memory_space<vmem>>, vector<32x256xbf16>
    %cst = arith.constant dense<0.000000e+00> : vector<256x256xf32>
    %3 = tpu.matmul %1, %2, %cst {dimension_numbers = #tpu.dot_dimension_numbers<[1], [0], [0], [1], [0, 0, 1, 1], [], []>} : vector<256x32xbf16>, vector<32x256xbf16>, vector<256x256xf32> -> vector<256x256xf32>
    %c0_3 = arith.constant 0 : index
    %c0_4 = arith.constant 0 : index
    %4 = vector.load %arg3[%c0_3, %c0_4] : memref<1x256xf32, #tpu.memory_space<vmem>>, vector<1x256xf32>
    %5 = vector.broadcast %4 : vector<1x256xf32> to vector<256x256xf32>
    %6 = arith.addf %3, %5 : vector<256x256xf32>
    %cst_5 = arith.constant 0.000000e+00 : f32
    %7 = vector.broadcast %cst_5 : f32 to vector<256x256xf32>
    %8 = arith.maximumf %6, %7 : vector<256x256xf32>
    %9 = arith.truncf %8 : vector<256x256xf32> to vector<256x256xbf16>
    %c0_6 = arith.constant 0 : index
    %c0_7 = arith.constant 0 : index
    %10 = vector.load %arg4[%c0_6, %c0_7] : memref<256x256xbf16, #tpu.memory_space<vmem>>, vector<256x256xbf16>
    %cst_8 = arith.constant dense<0.000000e+00> : vector<256x256xf32>
    %11 = tpu.matmul %9, %10, %cst_8 {dimension_numbers = #tpu.dot_dimension_numbers<[1], [0], [0], [1], [0, 0, 1, 1], [], []>} : vector<256x256xbf16>, vector<256x256xbf16>, vector<256x256xf32> -> vector<256x256xf32>
    %c0_9 = arith.constant 0 : index
    %c0_10 = arith.constant 0 : index
    %12 = vector.load %arg5[%c0_9, %c0_10] : memref<1x256xf32, #tpu.memory_space<vmem>>, vector<1x256xf32>
    %13 = vector.broadcast %12 : vector<1x256xf32> to vector<256x256xf32>
    %14 = arith.addf %11, %13 : vector<256x256xf32>
    %cst_11 = arith.constant 0.000000e+00 : f32
    %15 = vector.broadcast %cst_11 : f32 to vector<256x256xf32>
    %16 = arith.maximumf %14, %15 : vector<256x256xf32>
    %17 = arith.truncf %16 : vector<256x256xf32> to vector<256x256xbf16>
    %c0_12 = arith.constant 0 : index
    %c0_13 = arith.constant 0 : index
    %18 = vector.load %arg6[%c0_12, %c0_13] : memref<256x8xbf16, #tpu.memory_space<vmem>>, vector<256x8xbf16>
    %cst_14 = arith.constant dense<0.000000e+00> : vector<256x8xf32>
    %19 = tpu.matmul %17, %18, %cst_14 {dimension_numbers = #tpu.dot_dimension_numbers<[1], [0], [0], [1], [0, 0, 1, 1], [], []>} : vector<256x256xbf16>, vector<256x8xbf16>, vector<256x8xf32> -> vector<256x8xf32>
    %c0_15 = arith.constant 0 : index
    %c0_16 = arith.constant 0 : index
    %20 = vector.load %arg7[%c0_15, %c0_16] : memref<1x8xf32, #tpu.memory_space<vmem>>, vector<1x8xf32>
    %21 = vector.broadcast %20 : vector<1x8xf32> to vector<256x8xf32>
    %22 = arith.addf %19, %21 : vector<256x8xf32>
    %c0_17 = arith.constant 0 : index
    %c0_18 = arith.constant 0 : index
    %23 = vector.load %arg8[%c0_17, %c0_18] : memref<256x8xf32, #tpu.memory_space<vmem>>, vector<256x8xf32>
    tpu.vector_store %arg8[%c0_17, %c0_18], %22 {strides = array<i32>} : memref<256x8xf32, #tpu.memory_space<vmem>>, vector<256x8xf32>,
    return
  }
  func.func @transform_0(%arg0: i32) -> (i32, i32) {
    %c0_i32 = arith.constant 0 : i32
    %c0_i32_0 = arith.constant 0 : i32
    return %arg0, %c0_i32 : i32, i32
  }
  func.func @transform_1(%arg0: i32) -> (i32, i32) {
    %c0_i32 = arith.constant 0 : i32
    %c0_i32_0 = arith.constant 0 : i32
    %c0_i32_1 = arith.constant 0 : i32
    return %c0_i32, %c0_i32_0 : i32, i32
  }
  func.func @transform_2(%arg0: i32) -> (i32, i32) {
    %c0_i32 = arith.constant 0 : i32
    %c0_i32_0 = arith.constant 0 : i32
    %c0_i32_1 = arith.constant 0 : i32
    return %c0_i32, %c0_i32_0 : i32, i32
  }
  func.func @transform_3(%arg0: i32) -> (i32, i32) {
    %c0_i32 = arith.constant 0 : i32
    %c0_i32_0 = arith.constant 0 : i32
    %c0_i32_1 = arith.constant 0 : i32
    return %c0_i32, %c0_i32_0 : i32, i32
  }
  func.func @transform_4(%arg0: i32) -> (i32, i32) {
    %c0_i32 = arith.constant 0 : i32
    %c0_i32_0 = arith.constant 0 : i32
    %c0_i32_1 = arith.constant 0 : i32
    return %c0_i32, %c0_i32_0 : i32, i32
  }
  func.func @transform_5(%arg0: i32) -> (i32, i32) {
    %c0_i32 = arith.constant 0 : i32
    %c0_i32_0 = arith.constant 0 : i32
    %c0_i32_1 = arith.constant 0 : i32
    return %c0_i32, %c0_i32_0 : i32, i32
  }
  func.func @transform_6(%arg0: i32) -> (i32, i32) {
    %c0_i32 = arith.constant 0 : i32
    %c0_i32_0 = arith.constant 0 : i32
    %c0_i32_1 = arith.constant 0 : i32
    return %c0_i32, %c0_i32_0 : i32, i32
  }
  func.func @transform_7(%arg0: i32) -> (i32, i32) {
    %c0_i32 = arith.constant 0 : i32
    %c0_i32_0 = arith.constant 0 : i32
    return %arg0, %c0_i32 : i32, i32
  }
}

</mosaic_0001>

<llo_original>
// kernel: tpu_custom_call.1
$region0: #{tpu_custom_call.1}
  #allocation0 [shape = 'u32[]', space=smem, size = 0x4, offset = 0x4, fixed_abs, tag = 'smem constant byte address 0x4 - core index']
  #allocation1 [shape = 'u32[72,128]{1,0:T(1,128)}', space=vmem, size = 0x9000, scoped, tag = 'internal scratch']
  %s0 = inlined_call_operand.vmem [shape: f32[256,32], index: 0, kind: input, shape index: {}]
  %s1 = inlined_call_operand.vmem [shape: bf16[32,256], index: 1, kind: input, shape index: {}]
  %s2 = inlined_call_operand.vmem [shape: f32[1,256], index: 2, kind: input, shape index: {}]
  %s3 = inlined_call_operand.vmem [shape: bf16[256,256], index: 3, kind: input, shape index: {}]
  %s4 = inlined_call_operand.vmem [shape: f32[1,256], index: 4, kind: input, shape index: {}]
  %s5 = inlined_call_operand.vmem [shape: bf16[256,8], index: 5, kind: input, shape index: {}]
  %s6 = inlined_call_operand.vmem [shape: f32[1,8], index: 6, kind: input, shape index: {}]
  %s7 = inlined_call_operand.vmem [shape: f32[256,8], index: 7, kind: output, shape index: {}]
  %s8 = sld [smem:[#allocation0]]
  $region38: #{tpu_custom_call.1} parent=0
    _
  %s10 = ssub.s32 1, %s8
  %s11 = scalar_select 0, %s10, %s8
  // Predicated region
  $region2: #{tpu_custom_call.1} parent=0 // pred_check
    _
  $region3: #{tpu_custom_call.1} parent=0 // pred_check_branch
    %13 = sbr.rel (0) target = $region5
  $region4: #{tpu_custom_call.1} parent=0 // pred_region
    _
  $region5: #{tpu_custom_call.1} parent=0 // pred_fallthru
    _
  // Predicated region
  $region6: #{tpu_custom_call.1} parent=0 // pred_check
    _
  $region7: #{tpu_custom_call.1} parent=0 // pred_check_branch
    %15 = sbr.rel (0) target = $region9
  $region8: #{tpu_custom_call.1} parent=0 // pred_region
    _
  $region9: #{tpu_custom_call.1} parent=0 // pred_fallthru
    _
  // Predicated region
  $region10: #{tpu_custom_call.1} parent=0 // pred_check
    _
  $region11: #{tpu_custom_call.1} parent=0 // pred_check_branch
    %17 = sbr.rel (0) target = $region13
  $region12: #{tpu_custom_call.1} parent=0 // pred_region
    _
  $region13: #{tpu_custom_call.1} parent=0 // pred_fallthru
    _
  // Predicated region
  $region14: #{tpu_custom_call.1} parent=0 // pred_check
    _
  $region15: #{tpu_custom_call.1} parent=0 // pred_check_branch
    %19 = sbr.rel (0) target = $region17
  $region16: #{tpu_custom_call.1} parent=0 // pred_region
    _
  $region17: #{tpu_custom_call.1} parent=0 // pred_fallthru
    _
  // Predicated region
  $region18: #{tpu_custom_call.1} parent=0 // pred_check
    _
  $region19: #{tpu_custom_call.1} parent=0 // pred_check_branch
    %21 = sbr.rel (0) target = $region21
  $region20: #{tpu_custom_call.1} parent=0 // pred_region
    _
  $region21: #{tpu_custom_call.1} parent=0 // pred_fallthru
    _
  // Predicated region
  $region22: #{tpu_custom_call.1} parent=0 // pred_check
    _
  $region23: #{tpu_custom_call.1} parent=0 // pred_check_branch
    %23 = sbr.rel (0) target = $region25
  $region24: #{tpu_custom_call.1} parent=0 // pred_region
    _
  $region25: #{tpu_custom_call.1} parent=0 // pred_fallthru
    _
  // Predicated region
  $region26: #{tpu_custom_call.1} parent=0 // pred_check
    _
  $region27: #{tpu_custom_call.1} parent=0 // pred_check_branch
    %25 = sbr.rel (0) target = $region29
  $region28: #{tpu_custom_call.1} parent=0 // pred_region
    _
  $region29: #{tpu_custom_call.1} parent=0 // pred_fallthru
    _
  %v27 = vld [vmem:[%s0] sm:$0xff]
  %v28 = vld [vmem:[%s0 + $0x8] sm:$0xff]
  %v29 = vld [vmem:[%s0 + $0x10] sm:$0xff]
  %v30 = vld [vmem:[%s0 + $0x18] sm:$0xff]
  %v31 = vld [vmem:[%s0 + $0x20] sm:$0xff]
  %v32 = vld [vmem:[%s0 + $0x28] sm:$0xff]
  %v33 = vld [vmem:[%s0 + $0x30] sm:$0xff]
  %v34 = vld [vmem:[%s0 + $0x38] sm:$0xff]
  %v35 = vld [vmem:[%s0 + $0x40] sm:$0xff]
  %v36 = vld [vmem:[%s0 + $0x48] sm:$0xff]
  %v37 = vld [vmem:[%s0 + $0x50] sm:$0xff]
  %v38 = vld [vmem:[%s0 + $0x58] sm:$0xff]
  %v39 = vld [vmem:[%s0 + $0x60] sm:$0xff]
  %v40 = vld [vmem:[%s0 + $0x68] sm:$0xff]
  %v41 = vld [vmem:[%s0 + $0x70] sm:$0xff]
  %v42 = vld [vmem:[%s0 + $0x78] sm:$0xff]
  %v43 = vld [vmem:[%s0 + $0x80] sm:$0xff]
  %v44 = vld [vmem:[%s0 + $0x88] sm:$0xff]
  %v45 = vld [vmem:[%s0 + $0x90] sm:$0xff]
  %v46 = vld [vmem:[%s0 + $0x98] sm:$0xff]
  %v47 = vld [vmem:[%s0 + $0xa0] sm:$0xff]
  %v48 = vld [vmem:[%s0 + $0xa8] sm:$0xff]
  %v49 = vld [vmem:[%s0 + $0xb0] sm:$0xff]
  %v50 = vld [vmem:[%s0 + $0xb8] sm:$0xff]
  %v51 = vld [vmem:[%s0 + $0xc0] sm:$0xff]
  %v52 = vld [vmem:[%s0 + $0xc8] sm:$0xff]
  %v53 = vld [vmem:[%s0 + $0xd0] sm:$0xff]
  %v54 = vld [vmem:[%s0 + $0xd8] sm:$0xff]
  %v55 = vld [vmem:[%s0 + $0xe0] sm:$0xff]
  %v56 = vld [vmem:[%s0 + $0xe8] sm:$0xff]
  %v57 = vld [vmem:[%s0 + $0xf0] sm:$0xff]
  %v58 = vld [vmem:[%s0 + $0xf8] sm:$0xff]
  %v59 = vpack.c.bf16 %v28, %v27
  %v60 = vpack.c.bf16 %v30, %v29
  %v61 = vpack.c.bf16 %v32, %v31
  %v62 = vpack.c.bf16 %v34, %v33
  %v63 = vpack.c.bf16 %v36, %v35
  %v64 = vpack.c.bf16 %v38, %v37
  %v65 = vpack.c.bf16 %v40, %v39
  %v66 = vpack.c.bf16 %v42, %v41
  %v67 = vpack.c.bf16 %v44, %v43
  %v68 = vpack.c.bf16 %v46, %v45
  %v69 = vpack.c.bf16 %v48, %v47
  %v70 = vpack.c.bf16 %v50, %v49
  %v71 = vpack.c.bf16 %v52, %v51
  %v72 = vpack.c.bf16 %v54, %v53
  %v73 = vpack.c.bf16 %v56, %v55
  %v74 = vpack.c.bf16 %v58, %v57
  %v75 = vld [vmem:[%s1] sm:$0xff]
  %v76 = vld [vmem:[%s1 + $0x8] sm:$0xff]
  %v77 = vld [vmem:[%s1 + $0x10] sm:$0xff]
  %v78 = vld [vmem:[%s1 + $0x18] sm:$0xff]
  %v79 = vld [vmem:[%s2] sm:$0x3]
  %v81 = vperm.slane %v79, 0
  %v82 = vperm.slane %v79, 1
  %v89 = vunpack.c.l.b16 %v75
  %v90 = vunpack.c.h.b16 %v75
  %v91 = vunpack.c.l.b16 %v76
  %v92 = vunpack.c.h.b16 %v76
  %v93 = vunpack.c.l.b16 %v77
  %v94 = vunpack.c.h.b16 %v77
  %v95 = vunpack.c.l.b16 %v78
  %v96 = vunpack.c.h.b16 %v78
  %v97 = vpack.c.b16 %v91, %v89
  %v98 = vpack.c.b16 %v92, %v90
  %v99 = vpack.c.b16 %v95, %v93
  %v100 = vpack.c.b16 %v96, %v94
  %vm105 = vcmask 261120
  %v107 = vsel %vm105, %v59, 0
  %v110 = vsel %vm105, %v60, 0
  %v113 = vsel %vm105, %v61, 0
  %v116 = vsel %vm105, %v62, 0
  %v119 = vsel %vm105, %v63, 0
  %v122 = vsel %vm105, %v64, 0
  %v125 = vsel %vm105, %v65, 0
  %v128 = vsel %vm105, %v66, 0
  %v131 = vsel %vm105, %v67, 0
  %v134 = vsel %vm105, %v68, 0
  %v137 = vsel %vm105, %v69, 0
  %v140 = vsel %vm105, %v70, 0
  %v143 = vsel %vm105, %v71, 0
  %v146 = vsel %vm105, %v72, 0
  %v149 = vsel %vm105, %v73, 0
  %v152 = vsel %vm105, %v74, 0
  %154 = vmatpush.bf16.msra.mxu0 0
  %155 = vmatpush.bf16.msra.mxu0 0
  %156 = vmatpush.bf16.msra.mxu0 0
  %157 = vmatpush.bf16.msra.mxu0 0
  %158 = vmatpush.bf16.msra.mxu0 0
  %159 = vmatpush.bf16.msra.mxu0 0
  %160 = vmatpush.bf16.msra.mxu0 %v99
  %161 = vmatpush.bf16.msra.mxu0 %v97
  %162 = vmatmul.bf16.gmra.mxu0 %v107
  %v163 = vpop.f32.mrf.mxu0
  %v164 = vadd.f32 %v81, %v163
  %v165 = vpop.f32.mrf.mxu0
  %v166 = vadd.f32 %v81, %v165
  %167 = vmatmul.bf16.gmra.mxu0 %v110
  %v168 = vpop.f32.mrf.mxu0
  %v169 = vadd.f32 %v81, %v168
  %v170 = vpop.f32.mrf.mxu0
  %v171 = vadd.f32 %v81, %v170
  %172 = vmatmul.bf16.gmra.mxu0 %v113
  %v173 = vpop.f32.mrf.mxu0
  %v174 = vadd.f32 %v81, %v173
  %v175 = vpop.f32.mrf.mxu0
  %v176 = vadd.f32 %v81, %v175
  %177 = vmatmul.bf16.gmra.mxu0 %v116
  %v178 = vpop.f32.mrf.mxu0
  %v179 = vadd.f32 %v81, %v178
  %v180 = vpop.f32.mrf.mxu0
  %v181 = vadd.f32 %v81, %v180
  %182 = vmatmul.bf16.gmra.mxu0 %v119
  %v183 = vpop.f32.mrf.mxu0
  %v184 = vadd.f32 %v81, %v183
  %v185 = vpop.f32.mrf.mxu0
  %v186 = vadd.f32 %v81, %v185
  %187 = vmatmul.bf16.gmra.mxu0 %v122
  %v188 = vpop.f32.mrf.mxu0
  %v189 = vadd.f32 %v81, %v188
  %v190 = vpop.f32.mrf.mxu0
  %v191 = vadd.f32 %v81, %v190
  %192 = vmatmul.bf16.gmra.mxu0 %v125
  %v193 = vpop.f32.mrf.mxu0
  %v194 = vadd.f32 %v81, %v193
  %v195 = vpop.f32.mrf.mxu0
  %v196 = vadd.f32 %v81, %v195
  %197 = vmatmul.bf16.gmra.mxu0 %v128
  %v198 = vpop.f32.mrf.mxu0
  %v199 = vadd.f32 %v81, %v198
  %v200 = vpop.f32.mrf.mxu0
  %v201 = vadd.f32 %v81, %v200
  %202 = vmatmul.bf16.gmra.mxu0 %v131
  %v203 = vpop.f32.mrf.mxu0
  %v204 = vadd.f32 %v81, %v203
  %v205 = vpop.f32.mrf.mxu0
  %v206 = vadd.f32 %v81, %v205
  %207 = vmatmul.bf16.gmra.mxu0 %v134
  %v208 = vpop.f32.mrf.mxu0
  %v209 = vadd.f32 %v81, %v208
  %v210 = vpop.f32.mrf.mxu0
  %v211 = vadd.f32 %v81, %v210
  %212 = vmatmul.bf16.gmra.mxu0 %v137
  %v213 = vpop.f32.mrf.mxu0
  %v214 = vadd.f32 %v81, %v213
  %v215 = vpop.f32.mrf.mxu0
  %v216 = vadd.f32 %v81, %v215
  %217 = vmatmul.bf16.gmra.mxu0 %v140
  %v218 = vpop.f32.mrf.mxu0
  %v219 = vadd.f32 %v81, %v218
  %v220 = vpop.f32.mrf.mxu0
  %v221 = vadd.f32 %v81, %v220
  %222 = vmatmul.bf16.gmra.mxu0 %v143
  %v223 = vpop.f32.mrf.mxu0
  %v224 = vadd.f32 %v81, %v223
  %v225 = vpop.f32.mrf.mxu0
  %v226 = vadd.f32 %v81, %v225
  %227 = vmatmul.bf16.gmra.mxu0 %v146
  %v228 = vpop.f32.mrf.mxu0
  %v229 = vadd.f32 %v81, %v228
  %v230 = vpop.f32.mrf.mxu0
  %v231 = vadd.f32 %v81, %v230
  %232 = vmatmul.bf16.gmra.mxu0 %v149
  %v233 = vpop.f32.mrf.mxu0
  %v234 = vadd.f32 %v81, %v233
  %v235 = vpop.f32.mrf.mxu0
  %v236 = vadd.f32 %v81, %v235
  %237 = vmatmul.bf16.gmra.mxu0 %v152
  %v238 = vpop.f32.mrf.mxu0
  %v239 = vadd.f32 %v81, %v238
  %v240 = vpop.f32.mrf.mxu0
  %v241 = vadd.f32 %v81, %v240
  %242 = vdwg.mxu0
  %243 = vmatpush.bf16.msra.mxu0 0
  %244 = vmatpush.bf16.msra.mxu0 0
  %245 = vmatpush.bf16.msra.mxu0 0
  %246 = vmatpush.bf16.msra.mxu0 0
  %247 = vmatpush.bf16.msra.mxu0 0
  %248 = vmatpush.bf16.msra.mxu0 0
  %249 = vmatpush.bf16.msra.mxu0 %v100
  %250 = vmatpush.bf16.msra.mxu0 %v98
  %251 = vmatmul.bf16.gmra.mxu0 %v107
  %v252 = vpop.f32.mrf.mxu0
  %v253 = vadd.f32 %v82, %v252
  %v254 = vpop.f32.mrf.mxu0
  %v255 = vadd.f32 %v82, %v254
  %256 = vmatmul.bf16.gmra.mxu0 %v110
  %v257 = vpop.f32.mrf.mxu0
  %v258 = vadd.f32 %v82, %v257
  %v259 = vpop.f32.mrf.mxu0
  %v260 = vadd.f32 %v82, %v259
  %261 = vmatmul.bf16.gmra.mxu0 %v113
  %v262 = vpop.f32.mrf.mxu0
  %v263 = vadd.f32 %v82, %v262
  %v264 = vpop.f32.mrf.mxu0
  %v265 = vadd.f32 %v82, %v264
  %266 = vmatmul.bf16.gmra.mxu0 %v116
  %v267 = vpop.f32.mrf.mxu0
  %v268 = vadd.f32 %v82, %v267
  %v269 = vpop.f32.mrf.mxu0
  %v270 = vadd.f32 %v82, %v269
  %271 = vmatmul.bf16.gmra.mxu0 %v119
  %v272 = vpop.f32.mrf.mxu0
  %v273 = vadd.f32 %v82, %v272
  %v274 = vpop.f32.mrf.mxu0
  %v275 = vadd.f32 %v82, %v274
  %276 = vmatmul.bf16.gmra.mxu0 %v122
  %v277 = vpop.f32.mrf.mxu0
  %v278 = vadd.f32 %v82, %v277
  %v279 = vpop.f32.mrf.mxu0
  %v280 = vadd.f32 %v82, %v279
  %281 = vmatmul.bf16.gmra.mxu0 %v125
  %v282 = vpop.f32.mrf.mxu0
  %v283 = vadd.f32 %v82, %v282
  %v284 = vpop.f32.mrf.mxu0
  %v285 = vadd.f32 %v82, %v284
  %286 = vmatmul.bf16.gmra.mxu0 %v128
  %v287 = vpop.f32.mrf.mxu0
  %v288 = vadd.f32 %v82, %v287
  %v289 = vpop.f32.mrf.mxu0
  %v290 = vadd.f32 %v82, %v289
  %291 = vmatmul.bf16.gmra.mxu0 %v131
  %v292 = vpop.f32.mrf.mxu0
  %v293 = vadd.f32 %v82, %v292
  %v294 = vpop.f32.mrf.mxu0
  %v295 = vadd.f32 %v82, %v294
  %296 = vmatmul.bf16.gmra.mxu0 %v134
  %v297 = vpop.f32.mrf.mxu0
  %v298 = vadd.f32 %v82, %v297
  %v299 = vpop.f32.mrf.mxu0
  %v300 = vadd.f32 %v82, %v299
  %301 = vmatmul.bf16.gmra.mxu0 %v137
  %v302 = vpop.f32.mrf.mxu0
  %v303 = vadd.f32 %v82, %v302
  %v304 = vpop.f32.mrf.mxu0
  %v305 = vadd.f32 %v82, %v304
  %306 = vmatmul.bf16.gmra.mxu0 %v140
  %v307 = vpop.f32.mrf.mxu0
  %v308 = vadd.f32 %v82, %v307
  %v309 = vpop.f32.mrf.mxu0
  %v310 = vadd.f32 %v82, %v309
  %311 = vmatmul.bf16.gmra.mxu0 %v143
  %v312 = vpop.f32.mrf.mxu0
  %v313 = vadd.f32 %v82, %v312
  %v314 = vpop.f32.mrf.mxu0
  %v315 = vadd.f32 %v82, %v314
  %316 = vmatmul.bf16.gmra.mxu0 %v146
  %v317 = vpop.f32.mrf.mxu0
  %v318 = vadd.f32 %v82, %v317
  %v319 = vpop.f32.mrf.mxu0
  %v320 = vadd.f32 %v82, %v319
  %321 = vmatmul.bf16.gmra.mxu0 %v149
  %v322 = vpop.f32.mrf.mxu0
  %v323 = vadd.f32 %v82, %v322
  %v324 = vpop.f32.mrf.mxu0
  %v325 = vadd.f32 %v82, %v324
  %326 = vmatmul.bf16.gmra.mxu0 %v152
  %v327 = vpop.f32.mrf.mxu0
  %v328 = vadd.f32 %v82, %v327
  %v329 = vpop.f32.mrf.mxu0
  %v330 = vadd.f32 %v82, %v329
  %331 = vdwg.mxu0
  %v332 = vmax.f32 %v164, 0.0
  %v333 = vmax.f32 %v253, 0.0
  %v334 = vmax.f32 %v166, 0.0
  %v335 = vmax.f32 %v255, 0.0
  %v336 = vmax.f32 %v169, 0.0
  %v337 = vmax.f32 %v258, 0.0
  %v338 = vmax.f32 %v171, 0.0
  %v339 = vmax.f32 %v260, 0.0
  %v340 = vmax.f32 %v174, 0.0
  %v341 = vmax.f32 %v263, 0.0
  %v342 = vmax.f32 %v176, 0.0
  %v343 = vmax.f32 %v265, 0.0
  %v344 = vmax.f32 %v179, 0.0
  %v345 = vmax.f32 %v268, 0.0
  %v346 = vmax.f32 %v181, 0.0
  %v347 = vmax.f32 %v270, 0.0
  %v348 = vmax.f32 %v184, 0.0
  %v349 = vmax.f32 %v273, 0.0
  %v350 = vmax.f32 %v186, 0.0
  %v351 = vmax.f32 %v275, 0.0
  %v352 = vmax.f32 %v189, 0.0
  %v353 = vmax.f32 %v278, 0.0
  %v354 = vmax.f32 %v191, 0.0
  %v355 = vmax.f32 %v280, 0.0
  %v356 = vmax.f32 %v194, 0.0
  %v357 = vmax.f32 %v283, 0.0
  %v358 = vmax.f32 %v196, 0.0
  %v359 = vmax.f32 %v285, 0.0
  %v360 = vmax.f32 %v199, 0.0
  %v361 = vmax.f32 %v288, 0.0
  %v362 = vmax.f32 %v201, 0.0
  %v363 = vmax.f32 %v290, 0.0
  %v364 = vmax.f32 %v204, 0.0
  %v365 = vmax.f32 %v293, 0.0
  %v366 = vmax.f32 %v206, 0.0
  %v367 = vmax.f32 %v295, 0.0
  %v368 = vmax.f32 %v209, 0.0
  %v369 = vmax.f32 %v298, 0.0
  %v370 = vmax.f32 %v211, 0.0
  %v371 = vmax.f32 %v300, 0.0
  %v372 = vmax.f32 %v214, 0.0
  %v373 = vmax.f32 %v303, 0.0
  %v374 = vmax.f32 %v216, 0.0
  %v375 = vmax.f32 %v305, 0.0
  %v376 = vmax.f32 %v219, 0.0
  %v377 = vmax.f32 %v308, 0.0
  %v378 = vmax.f32 %v221, 0.0
  %v379 = vmax.f32 %v310, 0.0
  %v380 = vmax.f32 %v224, 0.0
  %v381 = vmax.f32 %v313, 0.0
  %v382 = vmax.f32 %v226, 0.0
  %v383 = vmax.f32 %v315, 0.0
  %v384 = vmax.f32 %v229, 0.0
  %v385 = vmax.f32 %v318, 0.0
  %v386 = vmax.f32 %v231, 0.0
  %v387 = vmax.f32 %v320, 0.0
  %v388 = vmax.f32 %v234, 0.0
  %v389 = vmax.f32 %v323, 0.0
  %v390 = vmax.f32 %v236, 0.0
  %v391 = vmax.f32 %v325, 0.0
  %v392 = vmax.f32 %v239, 0.0
  %v393 = vmax.f32 %v328, 0.0
  %v394 = vmax.f32 %v241, 0.0
  %v395 = vmax.f32 %v330, 0.0
  %v396 = vpack.c.bf16 %v334, %v332
  %v397 = vpack.c.bf16 %v335, %v333
  %v398 = vpack.c.bf16 %v338, %v336
  %v399 = vpack.c.bf16 %v339, %v337
  %v400 = vpack.c.bf16 %v342, %v340
  %v401 = vpack.c.bf16 %v343, %v341
  %v402 = vpack.c.bf16 %v346, %v344
  %v403 = vpack.c.bf16 %v347, %v345
  %v404 = vpack.c.bf16 %v350, %v348
  %v405 = vpack.c.bf16 %v351, %v349
  %v406 = vpack.c.bf16 %v354, %v352
  %v407 = vpack.c.bf16 %v355, %v353
  %v408 = vpack.c.bf16 %v358, %v356
  %v409 = vpack.c.bf16 %v359, %v357
  %v410 = vpack.c.bf16 %v362, %v360
  %v411 = vpack.c.bf16 %v363, %v361
  %v412 = vpack.c.bf16 %v366, %v364
  %v413 = vpack.c.bf16 %v367, %v365
  %v414 = vpack.c.bf16 %v370, %v368
  %v415 = vpack.c.bf16 %v371, %v369
  %v416 = vpack.c.bf16 %v374, %v372
  %v417 = vpack.c.bf16 %v375, %v373
  %v418 = vpack.c.bf16 %v378, %v376
  %v419 = vpack.c.bf16 %v379, %v377
  %v420 = vpack.c.bf16 %v382, %v380
  %v421 = vpack.c.bf16 %v383, %v381
  %v422 = vpack.c.bf16 %v386, %v384
  %v423 = vpack.c.bf16 %v387, %v385
  %v424 = vpack.c.bf16 %v390, %v388
  %v425 = vpack.c.bf16 %v391, %v389
  %v426 = vpack.c.bf16 %v394, %v392
  %v427 = vpack.c.bf16 %v395, %v393
  %v428 = vld [vmem:[%s3] sm:$0xff]
  %v429 = vld [vmem:[%s3 + $0x8] sm:$0xff]
  %v430 = vld [vmem:[%s3 + $0x10] sm:$0xff]
  %v431 = vld [vmem:[%s3 + $0x18] sm:$0xff]
  %v432 = vld [vmem:[%s3 + $0x20] sm:$0xff]
  %v433 = vld [vmem:[%s3 + $0x28] sm:$0xff]
  %v434 = vld [vmem:[%s3 + $0x30] sm:$0xff]
  %v435 = vld [vmem:[%s3 + $0x38] sm:$0xff]
  %v436 = vld [vmem:[%s3 + $0x40] sm:$0xff]
  %v437 = vld [vmem:[%s3 + $0x48] sm:$0xff]
  %v438 = vld [vmem:[%s3 + $0x50] sm:$0xff]
  %v439 = vld [vmem:[%s3 + $0x58] sm:$0xff]
  %v440 = vld [vmem:[%s3 + $0x60] sm:$0xff]
  %v441 = vld [vmem:[%s3 + $0x68] sm:$0xff]
  %v442 = vld [vmem:[%s3 + $0x70] sm:$0xff]
  %v443 = vld [vmem:[%s3 + $0x78] sm:$0xff]
  %v444 = vld [vmem:[%s3 + $0x80] sm:$0xff]
  %v445 = vld [vmem:[%s3 + $0x88] sm:$0xff]
  %v446 = vld [vmem:[%s3 + $0x90] sm:$0xff]
  %v447 = vld [vmem:[%s3 + $0x98] sm:$0xff]
  %v448 = vld [vmem:[%s3 + $0xa0] sm:$0xff]
  %v449 = vld [vmem:[%s3 + $0xa8] sm:$0xff]
  %v450 = vld [vmem:[%s3 + $0xb0] sm:$0xff]
  %v451 = vld [vmem:[%s3 + $0xb8] sm:$0xff]
  %v452 = vld [vmem:[%s3 + $0xc0] sm:$0xff]
  %v453 = vld [vmem:[%s3 + $0xc8] sm:$0xff]
  %v454 = vld [vmem:[%s3 + $0xd0] sm:$0xff]
  %v455 = vld [vmem:[%s3 + $0xd8] sm:$0xff]
  %v456 = vld [vmem:[%s3 + $0xe0] sm:$0xff]
  %v457 = vld [vmem:[%s3 + $0xe8] sm:$0xff]
  %v458 = vld [vmem:[%s3 + $0xf0] sm:$0xff]
  %v459 = vld [vmem:[%s3 + $0xf8] sm:$0xff]
  %v460 = vld [vmem:[%s4] sm:$0x3]
  %v462 = vperm.slane %v460, 0
  %v463 = vperm.slane %v460, 1
  %v498 = vunpack.c.l.b16 %v428
  %v499 = vunpack.c.h.b16 %v428
  %v500 = vunpack.c.l.b16 %v429
  %v501 = vunpack.c.h.b16 %v429
  %v502 = vunpack.c.l.b16 %v430
  %v503 = vunpack.c.h.b16 %v430
  %v504 = vunpack.c.l.b16 %v431
  %v505 = vunpack.c.h.b16 %v431
  %v506 = vunpack.c.l.b16 %v432
  %v507 = vunpack.c.h.b16 %v432
  %v508 = vunpack.c.l.b16 %v433
  %v509 = vunpack.c.h.b16 %v433
  %v510 = vunpack.c.l.b16 %v434
  %v511 = vunpack.c.h.b16 %v434
  %v512 = vunpack.c.l.b16 %v435
  %v513 = vunpack.c.h.b16 %v435
  %v514 = vunpack.c.l.b16 %v436
  %v515 = vunpack.c.h.b16 %v436
  %v516 = vunpack.c.l.b16 %v437
  %v517 = vunpack.c.h.b16 %v437
  %v518 = vunpack.c.l.b16 %v438
  %v519 = vunpack.c.h.b16 %v438
  %v520 = vunpack.c.l.b16 %v439
  %v521 = vunpack.c.h.b16 %v439
  %v522 = vunpack.c.l.b16 %v440
  %v523 = vunpack.c.h.b16 %v440
  %v524 = vunpack.c.l.b16 %v441
  %v525 = vunpack.c.h.b16 %v441
  %v526 = vunpack.c.l.b16 %v442
  %v527 = vunpack.c.h.b16 %v442
  %v528 = vunpack.c.l.b16 %v443
  %v529 = vunpack.c.h.b16 %v443
  %v530 = vunpack.c.l.b16 %v444
  %v531 = vunpack.c.h.b16 %v444
  %v532 = vunpack.c.l.b16 %v445
  %v533 = vunpack.c.h.b16 %v445
  %v534 = vunpack.c.l.b16 %v446
  %v535 = vunpack.c.h.b16 %v446
  %v536 = vunpack.c.l.b16 %v447
  %v537 = vunpack.c.h.b16 %v447
  %v538 = vunpack.c.l.b16 %v448
  %v539 = vunpack.c.h.b16 %v448
  %v540 = vunpack.c.l.b16 %v449
  %v541 = vunpack.c.h.b16 %v449
  %v542 = vunpack.c.l.b16 %v450
  %v543 = vunpack.c.h.b16 %v450
  %v544 = vunpack.c.l.b16 %v451
  %v545 = vunpack.c.h.b16 %v451
  %v546 = vunpack.c.l.b16 %v452
  %v547 = vunpack.c.h.b16 %v452
  %v548 = vunpack.c.l.b16 %v453
  %v549 = vunpack.c.h.b16 %v453
  %v550 = vunpack.c.l.b16 %v454
  %v551 = vunpack.c.h.b16 %v454
  %v552 = vunpack.c.l.b16 %v455
  %v553 = vunpack.c.h.b16 %v455
  %v554 = vunpack.c.l.b16 %v456
  %v555 = vunpack.c.h.b16 %v456
  %v556 = vunpack.c.l.b16 %v457
  %v557 = vunpack.c.h.b16 %v457
  %v558 = vunpack.c.l.b16 %v458
  %v559 = vunpack.c.h.b16 %v458
  %v560 = vunpack.c.l.b16 %v459
  %v561 = vunpack.c.h.b16 %v459
  %v562 = vpack.c.b16 %v500, %v498
  %v563 = vpack.c.b16 %v501, %v499
  %v564 = vpack.c.b16 %v504, %v502
  %v565 = vpack.c.b16 %v505, %v503
  %v566 = vpack.c.b16 %v508, %v506
  %v567 = vpack.c.b16 %v509, %v507
  %v568 = vpack.c.b16 %v512, %v510
  %v569 = vpack.c.b16 %v513, %v511
  %v570 = vpack.c.b16 %v516, %v514
  %v571 = vpack.c.b16 %v517, %v515
  %v572 = vpack.c.b16 %v520, %v518
  %v573 = vpack.c.b16 %v521, %v519
  %v574 = vpack.c.b16 %v524, %v522
  %v575 = vpack.c.b16 %v525, %v523
  %v576 = vpack.c.b16 %v528, %v526
  %v577 = vpack.c.b16 %v529, %v527
  %v578 = vpack.c.b16 %v532, %v530
  %v579 = vpack.c.b16 %v533, %v531
  %v580 = vpack.c.b16 %v536, %v534
  %v581 = vpack.c.b16 %v537, %v535
  %v582 = vpack.c.b16 %v540, %v538
  %v583 = vpack.c.b16 %v541, %v539
  %v584 = vpack.c.b16 %v544, %v542
  %v585 = vpack.c.b16 %v545, %v543
  %v586 = vpack.c.b16 %v548, %v546
  %v587 = vpack.c.b16 %v549, %v547
  %v588 = vpack.c.b16 %v552, %v550
  %v589 = vpack.c.b16 %v553, %v551
  %v590 = vpack.c.b16 %v556, %v554
  %v591 = vpack.c.b16 %v557, %v555
  %v592 = vpack.c.b16 %v560, %v558
  %v593 = vpack.c.b16 %v561, %v559
  %626 = vmatpush.bf16.msra.mxu0 %v576
  %627 = vmatpush.bf16.msra.mxu0 %v574
  %628 = vmatpush.bf16.msra.mxu0 %v572
  %629 = vmatpush.bf16.msra.mxu0 %v570
  %630 = vmatpush.bf16.msra.mxu0 %v568
  %631 = vmatpush.bf16.msra.mxu0 %v566
  %632 = vmatpush.bf16.msra.mxu0 %v564
  %633 = vmatpush.bf16.msra.mxu0 %v562
  %634 = vmatmul.bf16.gmra.mxu0 %v396
  %v635 = vpop.f32.mrf.mxu0
  %v636 = vadd.f32 %v462, %v635
  %v637 = vpop.f32.mrf.mxu0
  %v638 = vadd.f32 %v462, %v637
  %639 = vmatmul.bf16.gmra.mxu0 %v398
  %v640 = vpop.f32.mrf.mxu0
  %v641 = vadd.f32 %v462, %v640
  %v642 = vpop.f32.mrf.mxu0
  %v643 = vadd.f32 %v462, %v642
  %644 = vmatmul.bf16.gmra.mxu0 %v400
  %v645 = vpop.f32.mrf.mxu0
  %v646 = vadd.f32 %v462, %v645
  %v647 = vpop.f32.mrf.mxu0
  %v648 = vadd.f32 %v462, %v647
  %649 = vmatmul.bf16.gmra.mxu0 %v402
  %v650 = vpop.f32.mrf.mxu0
  %v651 = vadd.f32 %v462, %v650
  %v652 = vpop.f32.mrf.mxu0
  %v653 = vadd.f32 %v462, %v652
  %654 = vmatmul.bf16.gmra.mxu0 %v404
  %v655 = vpop.f32.mrf.mxu0
  %v656 = vadd.f32 %v462, %v655
  %v657 = vpop.f32.mrf.mxu0
  %v658 = vadd.f32 %v462, %v657
  %659 = vmatmul.bf16.gmra.mxu0 %v406
  %v660 = vpop.f32.mrf.mxu0
  %v661 = vadd.f32 %v462, %v660
  %v662 = vpop.f32.mrf.mxu0
  %v663 = vadd.f32 %v462, %v662
  %664 = vmatmul.bf16.gmra.mxu0 %v408
  %v665 = vpop.f32.mrf.mxu0
  %v666 = vadd.f32 %v462, %v665
  %v667 = vpop.f32.mrf.mxu0
  %v668 = vadd.f32 %v462, %v667
  %669 = vmatmul.bf16.gmra.mxu0 %v410
  %v670 = vpop.f32.mrf.mxu0
  %v671 = vadd.f32 %v462, %v670
  %v672 = vpop.f32.mrf.mxu0
  %v673 = vadd.f32 %v462, %v672
  %674 = vmatmul.bf16.gmra.mxu0 %v412
  %v675 = vpop.f32.mrf.mxu0
  %v676 = vadd.f32 %v462, %v675
  %v677 = vpop.f32.mrf.mxu0
  %v678 = vadd.f32 %v462, %v677
  %679 = vmatmul.bf16.gmra.mxu0 %v414
  %v680 = vpop.f32.mrf.mxu0
  %v681 = vadd.f32 %v462, %v680
  %v682 = vpop.f32.mrf.mxu0
  %v683 = vadd.f32 %v462, %v682
  %684 = vmatmul.bf16.gmra.mxu0 %v416
  %v685 = vpop.f32.mrf.mxu0
  %v686 = vadd.f32 %v462, %v685
  %v687 = vpop.f32.mrf.mxu0
  %v688 = vadd.f32 %v462, %v687
  %689 = vmatmul.bf16.gmra.mxu0 %v418
  %v690 = vpop.f32.mrf.mxu0
  %v691 = vadd.f32 %v462, %v690
  %v692 = vpop.f32.mrf.mxu0
  %v693 = vadd.f32 %v462, %v692
  %694 = vmatmul.bf16.gmra.mxu0 %v420
  %v695 = vpop.f32.mrf.mxu0
  %v696 = vadd.f32 %v462, %v695
  %v697 = vpop.f32.mrf.mxu0
  %v698 = vadd.f32 %v462, %v697
  %699 = vmatmul.bf16.gmra.mxu0 %v422
  %v700 = vpop.f32.mrf.mxu0
  %v701 = vadd.f32 %v462, %v700
  %v702 = vpop.f32.mrf.mxu0
  %v703 = vadd.f32 %v462, %v702
  %704 = vmatmul.bf16.gmra.mxu0 %v424
  %v705 = vpop.f32.mrf.mxu0
  %v706 = vadd.f32 %v462, %v705
  %v707 = vpop.f32.mrf.mxu0
  %v708 = vadd.f32 %v462, %v707
  %709 = vmatmul.bf16.gmra.mxu0 %v426
  %v710 = vpop.f32.mrf.mxu0
  %v711 = vadd.f32 %v462, %v710
  %v712 = vpop.f32.mrf.mxu0
  %v713 = vadd.f32 %v462, %v712
  %714 = vdwg.mxu0
  %715 = vmatpush.bf16.msra.mxu0 %v592
  %716 = vmatpush.bf16.msra.mxu0 %v590
  %717 = vmatpush.bf16.msra.mxu0 %v588
  %718 = vmatpush.bf16.msra.mxu0 %v586
  %719 = vmatpush.bf16.msra.mxu0 %v584
  %720 = vmatpush.bf16.msra.mxu0 %v582
  %721 = vmatpush.bf16.msra.mxu0 %v580
  %722 = vmatpush.bf16.msra.mxu0 %v578
  %723 = vmatmul.bf16.gmra.mxu0 %v397
  %v724 = vpop.f32.mrf.mxu0
  %v725 = vadd.f32 %v636, %v724
  %v726 = vpop.f32.mrf.mxu0
  %v727 = vadd.f32 %v638, %v726
  %728 = vmatmul.bf16.gmra.mxu0 %v399
  %v729 = vpop.f32.mrf.mxu0
  %v730 = vadd.f32 %v641, %v729
  %v731 = vpop.f32.mrf.mxu0
  %v732 = vadd.f32 %v643, %v731
  %733 = vmatmul.bf16.gmra.mxu0 %v401
  %v734 = vpop.f32.mrf.mxu0
  %v735 = vadd.f32 %v646, %v734
  %v736 = vpop.f32.mrf.mxu0
  %v737 = vadd.f32 %v648, %v736
  %738 = vmatmul.bf16.gmra.mxu0 %v403
  %v739 = vpop.f32.mrf.mxu0
  %v740 = vadd.f32 %v651, %v739
  %v741 = vpop.f32.mrf.mxu0
  %v742 = vadd.f32 %v653, %v741
  %743 = vmatmul.bf16.gmra.mxu0 %v405
  %v744 = vpop.f32.mrf.mxu0
  %v745 = vadd.f32 %v656, %v744
  %v746 = vpop.f32.mrf.mxu0
  %v747 = vadd.f32 %v658, %v746
  %748 = vmatmul.bf16.gmra.mxu0 %v407
  %v749 = vpop.f32.mrf.mxu0
  %v750 = vadd.f32 %v661, %v749
  %v751 = vpop.f32.mrf.mxu0
  %v752 = vadd.f32 %v663, %v751
  %753 = vmatmul.bf16.gmra.mxu0 %v409
  %v754 = vpop.f32.mrf.mxu0
  %v755 = vadd.f32 %v666, %v754
  %v756 = vpop.f32.mrf.mxu0
  %v757 = vadd.f32 %v668, %v756
  %758 = vmatmul.bf16.gmra.mxu0 %v411
  %v759 = vpop.f32.mrf.mxu0
  %v760 = vadd.f32 %v671, %v759
  %v761 = vpop.f32.mrf.mxu0
  %v762 = vadd.f32 %v673, %v761
  %763 = vmatmul.bf16.gmra.mxu0 %v413
  %v764 = vpop.f32.mrf.mxu0
  %v765 = vadd.f32 %v676, %v764
  %v766 = vpop.f32.mrf.mxu0
  %v767 = vadd.f32 %v678, %v766
  %768 = vmatmul.bf16.gmra.mxu0 %v415
  %v769 = vpop.f32.mrf.mxu0
  %v770 = vadd.f32 %v681, %v769
  %v771 = vpop.f32.mrf.mxu0
  %v772 = vadd.f32 %v683, %v771
  %773 = vmatmul.bf16.gmra.mxu0 %v417
  %v774 = vpop.f32.mrf.mxu0
  %v775 = vadd.f32 %v686, %v774
  %v776 = vpop.f32.mrf.mxu0
  %v777 = vadd.f32 %v688, %v776
  %778 = vmatmul.bf16.gmra.mxu0 %v419
  %v779 = vpop.f32.mrf.mxu0
  %v780 = vadd.f32 %v691, %v779
  %v781 = vpop.f32.mrf.mxu0
  %v782 = vadd.f32 %v693, %v781
  %783 = vmatmul.bf16.gmra.mxu0 %v421
  %v784 = vpop.f32.mrf.mxu0
  %v785 = vadd.f32 %v696, %v784
  %v786 = vpop.f32.mrf.mxu0
  %v787 = vadd.f32 %v698, %v786
  %788 = vmatmul.bf16.gmra.mxu0 %v423
  %v789 = vpop.f32.mrf.mxu0
  %v790 = vadd.f32 %v701, %v789
  %v791 = vpop.f32.mrf.mxu0
  %v792 = vadd.f32 %v703, %v791
  %793 = vmatmul.bf16.gmra.mxu0 %v425
  %v794 = vpop.f32.mrf.mxu0
  %v795 = vadd.f32 %v706, %v794
  %v796 = vpop.f32.mrf.mxu0
  %v797 = vadd.f32 %v708, %v796
  %798 = vmatmul.bf16.gmra.mxu0 %v427
  %v799 = vpop.f32.mrf.mxu0
  %v800 = vadd.f32 %v711, %v799
  %v801 = vpop.f32.mrf.mxu0
  %v802 = vadd.f32 %v713, %v801
  %803 = vdwg.mxu0
  %804 = vmatpush.bf16.msra.mxu0 %v577
  %805 = vmatpush.bf16.msra.mxu0 %v575
  %806 = vmatpush.bf16.msra.mxu0 %v573
  %807 = vmatpush.bf16.msra.mxu0 %v571
  %808 = vmatpush.bf16.msra.mxu0 %v569
  %809 = vmatpush.bf16.msra.mxu0 %v567
  %810 = vmatpush.bf16.msra.mxu0 %v565
  %811 = vmatpush.bf16.msra.mxu0 %v563
  %812 = vmatmul.bf16.gmra.mxu0 %v396
  %v813 = vpop.f32.mrf.mxu0
  %v814 = vadd.f32 %v463, %v813
  %v815 = vpop.f32.mrf.mxu0
  %v816 = vadd.f32 %v463, %v815
  %817 = vmatmul.bf16.gmra.mxu0 %v398
  %v818 = vpop.f32.mrf.mxu0
  %v819 = vadd.f32 %v463, %v818
  %v820 = vpop.f32.mrf.mxu0
  %v821 = vadd.f32 %v463, %v820
  %822 = vmatmul.bf16.gmra.mxu0 %v400
  %v823 = vpop.f32.mrf.mxu0
  %v824 = vadd.f32 %v463, %v823
  %v825 = vpop.f32.mrf.mxu0
  %v826 = vadd.f32 %v463, %v825
  %827 = vmatmul.bf16.gmra.mxu0 %v402
  %v828 = vpop.f32.mrf.mxu0
  %v829 = vadd.f32 %v463, %v828
  %v830 = vpop.f32.mrf.mxu0
  %v831 = vadd.f32 %v463, %v830
  %832 = vmatmul.bf16.gmra.mxu0 %v404
  %v833 = vpop.f32.mrf.mxu0
  %v834 = vadd.f32 %v463, %v833
  %v835 = vpop.f32.mrf.mxu0
  %v836 = vadd.f32 %v463, %v835
  %837 = vmatmul.bf16.gmra.mxu0 %v406
  %v838 = vpop.f32.mrf.mxu0
  %v839 = vadd.f32 %v463, %v838
  %v840 = vpop.f32.mrf.mxu0
  %v841 = vadd.f32 %v463, %v840
  %842 = vmatmul.bf16.gmra.mxu0 %v408
  %v843 = vpop.f32.mrf.mxu0
  %v844 = vadd.f32 %v463, %v843
  %v845 = vpop.f32.mrf.mxu0
  %v846 = vadd.f32 %v463, %v845
  %847 = vmatmul.bf16.gmra.mxu0 %v410
  %v848 = vpop.f32.mrf.mxu0
  %v849 = vadd.f32 %v463, %v848
  %v850 = vpop.f32.mrf.mxu0
  %v851 = vadd.f32 %v463, %v850
  %852 = vmatmul.bf16.gmra.mxu0 %v412
  %v853 = vpop.f32.mrf.mxu0
  %v854 = vadd.f32 %v463, %v853
  %v855 = vpop.f32.mrf.mxu0
  %v856 = vadd.f32 %v463, %v855
  %857 = vmatmul.bf16.gmra.mxu0 %v414
  %v858 = vpop.f32.mrf.mxu0
  %v859 = vadd.f32 %v463, %v858
  %v860 = vpop.f32.mrf.mxu0
  %v861 = vadd.f32 %v463, %v860
  %862 = vmatmul.bf16.gmra.mxu0 %v416
  %v863 = vpop.f32.mrf.mxu0
  %v864 = vadd.f32 %v463, %v863
  %v865 = vpop.f32.mrf.mxu0
  %v866 = vadd.f32 %v463, %v865
  %867 = vmatmul.bf16.gmra.mxu0 %v418
  %v868 = vpop.f32.mrf.mxu0
  %v869 = vadd.f32 %v463, %v868
  %v870 = vpop.f32.mrf.mxu0
  %v871 = vadd.f32 %v463, %v870
  %872 = vmatmul.bf16.gmra.mxu0 %v420
  %v873 = vpop.f32.mrf.mxu0
  %v874 = vadd.f32 %v463, %v873
  %v875 = vpop.f32.mrf.mxu0
  %v876 = vadd.f32 %v463, %v875
  %877 = vmatmul.bf16.gmra.mxu0 %v422
  %v878 = vpop.f32.mrf.mxu0
  %v879 = vadd.f32 %v463, %v878
  %v880 = vpop.f32.mrf.mxu0
  %v881 = vadd.f32 %v463, %v880
  %882 = vmatmul.bf16.gmra.mxu0 %v424
  %v883 = vpop.f32.mrf.mxu0
  %v884 = vadd.f32 %v463, %v883
  %v885 = vpop.f32.mrf.mxu0
  %v886 = vadd.f32 %v463, %v885
  %887 = vmatmul.bf16.gmra.mxu0 %v426
  %v888 = vpop.f32.mrf.mxu0
  %v889 = vadd.f32 %v463, %v888
  %v890 = vpop.f32.mrf.mxu0
  %v891 = vadd.f32 %v463, %v890
  %892 = vdwg.mxu0
  %893 = vmatpush.bf16.msra.mxu0 %v593
  %894 = vmatpush.bf16.msra.mxu0 %v591
  %895 = vmatpush.bf16.msra.mxu0 %v589
  %896 = vmatpush.bf16.msra.mxu0 %v587
  %897 = vmatpush.bf16.msra.mxu0 %v585
  %898 = vmatpush.bf16.msra.mxu0 %v583
  %899 = vmatpush.bf16.msra.mxu0 %v581
  %900 = vmatpush.bf16.msra.mxu0 %v579
  %901 = vmatmul.bf16.gmra.mxu0 %v397
  %v902 = vpop.f32.mrf.mxu0
  %v903 = vadd.f32 %v814, %v902
  %v904 = vpop.f32.mrf.mxu0
  %v905 = vadd.f32 %v816, %v904
  %906 = vmatmul.bf16.gmra.mxu0 %v399
  %v907 = vpop.f32.mrf.mxu0
  %v908 = vadd.f32 %v819, %v907
  %v909 = vpop.f32.mrf.mxu0
  %v910 = vadd.f32 %v821, %v909
  %911 = vmatmul.bf16.gmra.mxu0 %v401
  %v912 = vpop.f32.mrf.mxu0
  %v913 = vadd.f32 %v824, %v912
  %v914 = vpop.f32.mrf.mxu0
  %v915 = vadd.f32 %v826, %v914
  %916 = vmatmul.bf16.gmra.mxu0 %v403
  %v917 = vpop.f32.mrf.mxu0
  %v918 = vadd.f32 %v829, %v917
  %v919 = vpop.f32.mrf.mxu0
  %v920 = vadd.f32 %v831, %v919
  %921 = vmatmul.bf16.gmra.mxu0 %v405
  %v922 = vpop.f32.mrf.mxu0
  %v923 = vadd.f32 %v834, %v922
  %v924 = vpop.f32.mrf.mxu0
  %v925 = vadd.f32 %v836, %v924
  %926 = vmatmul.bf16.gmra.mxu0 %v407
  %v927 = vpop.f32.mrf.mxu0
  %v928 = vadd.f32 %v839, %v927
  %v929 = vpop.f32.mrf.mxu0
  %v930 = vadd.f32 %v841, %v929
  %931 = vmatmul.bf16.gmra.mxu0 %v409
  %v932 = vpop.f32.mrf.mxu0
  %v933 = vadd.f32 %v844, %v932
  %v934 = vpop.f32.mrf.mxu0
  %v935 = vadd.f32 %v846, %v934
  %936 = vmatmul.bf16.gmra.mxu0 %v411
  %v937 = vpop.f32.mrf.mxu0
  %v938 = vadd.f32 %v849, %v937
  %v939 = vpop.f32.mrf.mxu0
  %v940 = vadd.f32 %v851, %v939
  %941 = vmatmul.bf16.gmra.mxu0 %v413
  %v942 = vpop.f32.mrf.mxu0
  %v943 = vadd.f32 %v854, %v942
  %v944 = vpop.f32.mrf.mxu0
  %v945 = vadd.f32 %v856, %v944
  %946 = vmatmul.bf16.gmra.mxu0 %v415
  %v947 = vpop.f32.mrf.mxu0
  %v948 = vadd.f32 %v859, %v947
  %v949 = vpop.f32.mrf.mxu0
  %v950 = vadd.f32 %v861, %v949
  %951 = vmatmul.bf16.gmra.mxu0 %v417
  %v952 = vpop.f32.mrf.mxu0
  %v953 = vadd.f32 %v864, %v952
  %v954 = vpop.f32.mrf.mxu0
  %v955 = vadd.f32 %v866, %v954
  %956 = vmatmul.bf16.gmra.mxu0 %v419
  %v957 = vpop.f32.mrf.mxu0
  %v958 = vadd.f32 %v869, %v957
  %v959 = vpop.f32.mrf.mxu0
  %v960 = vadd.f32 %v871, %v959
  %961 = vmatmul.bf16.gmra.mxu0 %v421
  %v962 = vpop.f32.mrf.mxu0
  %v963 = vadd.f32 %v874, %v962
  %v964 = vpop.f32.mrf.mxu0
  %v965 = vadd.f32 %v876, %v964
  %966 = vmatmul.bf16.gmra.mxu0 %v423
  %v967 = vpop.f32.mrf.mxu0
  %v968 = vadd.f32 %v879, %v967
  %v969 = vpop.f32.mrf.mxu0
  %v970 = vadd.f32 %v881, %v969
  %971 = vmatmul.bf16.gmra.mxu0 %v425
  %v972 = vpop.f32.mrf.mxu0
  %v973 = vadd.f32 %v884, %v972
  %v974 = vpop.f32.mrf.mxu0
  %v975 = vadd.f32 %v886, %v974
  %976 = vmatmul.bf16.gmra.mxu0 %v427
  %v977 = vpop.f32.mrf.mxu0
  %v978 = vadd.f32 %v889, %v977
  %v979 = vpop.f32.mrf.mxu0
  %v980 = vadd.f32 %v891, %v979
  %981 = vdwg.mxu0
  %v982 = vmax.f32 %v725, 0.0
  %v983 = vmax.f32 %v903, 0.0
  %v984 = vmax.f32 %v727, 0.0
  %v985 = vmax.f32 %v905, 0.0
  %v986 = vmax.f32 %v730, 0.0
  %v987 = vmax.f32 %v908, 0.0
  %v988 = vmax.f32 %v732, 0.0
  %v989 = vmax.f32 %v910, 0.0
  %v990 = vmax.f32 %v735, 0.0
  %v991 = vmax.f32 %v913, 0.0
  %v992 = vmax.f32 %v737, 0.0
  %v993 = vmax.f32 %v915, 0.0
  %v994 = vmax.f32 %v740, 0.0
  %v995 = vmax.f32 %v918, 0.0
  %v996 = vmax.f32 %v742, 0.0
  %v997 = vmax.f32 %v920, 0.0
  %v998 = vmax.f32 %v745, 0.0
  %v999 = vmax.f32 %v923, 0.0
  %v1000 = vmax.f32 %v747, 0.0
  %v1001 = vmax.f32 %v925, 0.0
  %v1002 = vmax.f32 %v750, 0.0
  %v1003 = vmax.f32 %v928, 0.0
  %v1004 = vmax.f32 %v752, 0.0
  %v1005 = vmax.f32 %v930, 0.0
  %v1006 = vmax.f32 %v755, 0.0
  %v1007 = vmax.f32 %v933, 0.0
  %v1008 = vmax.f32 %v757, 0.0
  %v1009 = vmax.f32 %v935, 0.0
  %v1010 = vmax.f32 %v760, 0.0
  %v1011 = vmax.f32 %v938, 0.0
  %v1012 = vmax.f32 %v762, 0.0
  %v1013 = vmax.f32 %v940, 0.0
  %v1014 = vmax.f32 %v765, 0.0
  %v1015 = vmax.f32 %v943, 0.0
  %v1016 = vmax.f32 %v767, 0.0
  %v1017 = vmax.f32 %v945, 0.0
  %v1018 = vmax.f32 %v770, 0.0
  %v1019 = vmax.f32 %v948, 0.0
  %v1020 = vmax.f32 %v772, 0.0
  %v1021 = vmax.f32 %v950, 0.0
  %v1022 = vmax.f32 %v775, 0.0
  %v1023 = vmax.f32 %v953, 0.0
  %v1024 = vmax.f32 %v777, 0.0
  %v1025 = vmax.f32 %v955, 0.0
  %v1026 = vmax.f32 %v780, 0.0
  %v1027 = vmax.f32 %v958, 0.0
  %v1028 = vmax.f32 %v782, 0.0
  %v1029 = vmax.f32 %v960, 0.0
  %v1030 = vmax.f32 %v785, 0.0
  %v1031 = vmax.f32 %v963, 0.0
  %v1032 = vmax.f32 %v787, 0.0
  %v1033 = vmax.f32 %v965, 0.0
  %v1034 = vmax.f32 %v790, 0.0
  %v1035 = vmax.f32 %v968, 0.0
  %v1036 = vmax.f32 %v792, 0.0
  %v1037 = vmax.f32 %v970, 0.0
  %v1038 = vmax.f32 %v795, 0.0
  %v1039 = vmax.f32 %v973, 0.0
  %v1040 = vmax.f32 %v797, 0.0
  %v1041 = vmax.f32 %v975, 0.0
  %v1042 = vmax.f32 %v800, 0.0
  %v1043 = vmax.f32 %v978, 0.0
  %v1044 = vmax.f32 %v802, 0.0
  %v1045 = vmax.f32 %v980, 0.0
  %v1046 = vpack.c.bf16 %v984, %v982
  %v1047 = vpack.c.bf16 %v985, %v983
  %v1048 = vpack.c.bf16 %v988, %v986
  %v1049 = vpack.c.bf16 %v989, %v987
  %v1050 = vpack.c.bf16 %v992, %v990
  %v1051 = vpack.c.bf16 %v993, %v991
  %v1052 = vpack.c.bf16 %v996, %v994
  %v1053 = vpack.c.bf16 %v997, %v995
  %v1054 = vpack.c.bf16 %v1000, %v998
  %v1055 = vpack.c.bf16 %v1001, %v999
  %v1056 = vpack.c.bf16 %v1004, %v1002
  %v1057 = vpack.c.bf16 %v1005, %v1003
  %v1058 = vpack.c.bf16 %v1008, %v1006
  %v1059 = vpack.c.bf16 %v1009, %v1007
  %v1060 = vpack.c.bf16 %v1012, %v1010
  %v1061 = vpack.c.bf16 %v1013, %v1011
  %v1062 = vpack.c.bf16 %v1016, %v1014
  %v1063 = vpack.c.bf16 %v1017, %v1015
  %v1064 = vpack.c.bf16 %v1020, %v1018
  %v1065 = vpack.c.bf16 %v1021, %v1019
  %v1066 = vpack.c.bf16 %v1024, %v1022
  %v1067 = vpack.c.bf16 %v1025, %v1023
  %v1068 = vpack.c.bf16 %v1028, %v1026
  %v1069 = vpack.c.bf16 %v1029, %v1027
  %v1070 = vpack.c.bf16 %v1032, %v1030
  %v1071 = vpack.c.bf16 %v1033, %v1031
  %v1072 = vpack.c.bf16 %v1036, %v1034
  %v1073 = vpack.c.bf16 %v1037, %v1035
  %v1074 = vpack.c.bf16 %v1040, %v1038
  %v1075 = vpack.c.bf16 %v1041, %v1039
  %v1076 = vpack.c.bf16 %v1044, %v1042
  %v1077 = vpack.c.bf16 %v1045, %v1043
  %v1078 = vld [vmem:[%s5] sm:$0xf]
  %v1079 = vld [vmem:[%s5 + $0x4] sm:$0xf]
  %v1080 = vld [vmem:[%s5 + $0x8] sm:$0xf]
  %v1081 = vld [vmem:[%s5 + $0xc] sm:$0xf]
  %v1082 = vld [vmem:[%s5 + $0x10] sm:$0xf]
  %v1083 = vld [vmem:[%s5 + $0x14] sm:$0xf]
  %v1084 = vld [vmem:[%s5 + $0x18] sm:$0xf]
  %v1085 = vld [vmem:[%s5 + $0x1c] sm:$0xf]
  %v1086 = vld [vmem:[%s5 + $0x20] sm:$0xf]
  %v1087 = vld [vmem:[%s5 + $0x24] sm:$0xf]
  %v1088 = vld [vmem:[%s5 + $0x28] sm:$0xf]
  %v1089 = vld [vmem:[%s5 + $0x2c] sm:$0xf]
  %v1090 = vld [vmem:[%s5 + $0x30] sm:$0xf]
  %v1091 = vld [vmem:[%s5 + $0x34] sm:$0xf]
  %v1092 = vld [vmem:[%s5 + $0x38] sm:$0xf]
  %v1093 = vld [vmem:[%s5 + $0x3c] sm:$0xf]
  %v1094 = vld [vmem:[%s5 + $0x40] sm:$0xf]
  %v1095 = vld [vmem:[%s5 + $0x44] sm:$0xf]
  %v1096 = vld [vmem:[%s5 + $0x48] sm:$0xf]
  %v1097 = vld [vmem:[%s5 + $0x4c] sm:$0xf]
  %v1098 = vld [vmem:[%s5 + $0x50] sm:$0xf]
  %v1099 = vld [vmem:[%s5 + $0x54] sm:$0xf]
  %v1100 = vld [vmem:[%s5 + $0x58] sm:$0xf]
  %v1101 = vld [vmem:[%s5 + $0x5c] sm:$0xf]
  %v1102 = vld [vmem:[%s5 + $0x60] sm:$0xf]
  %v1103 = vld [vmem:[%s5 + $0x64] sm:$0xf]
  %v1104 = vld [vmem:[%s5 + $0x68] sm:$0xf]
  %v1105 = vld [vmem:[%s5 + $0x6c] sm:$0xf]
  %v1106 = vld [vmem:[%s5 + $0x70] sm:$0xf]
  %v1107 = vld [vmem:[%s5 + $0x74] sm:$0xf]
  %v1108 = vld [vmem:[%s5 + $0x78] sm:$0xf]
  %v1109 = vld [vmem:[%s5 + $0x7c] sm:$0xf]
  %v1110 = vld [vmem:[%s6] sm:$0x1]
  %v1112 = vperm.slane %v1110, 0
  %v1146 = vunpack.c.l.b16 %v1078
  %v1147 = vunpack.c.l.b16 %v1079
  %v1148 = vunpack.c.l.b16 %v1080
  %v1149 = vunpack.c.l.b16 %v1081
  %v1150 = vunpack.c.l.b16 %v1082
  %v1151 = vunpack.c.l.b16 %v1083
  %v1152 = vunpack.c.l.b16 %v1084
  %v1153 = vunpack.c.l.b16 %v1085
  %v1154 = vunpack.c.l.b16 %v1086
  %v1155 = vunpack.c.l.b16 %v1087
  %v1156 = vunpack.c.l.b16 %v1088
  %v1157 = vunpack.c.l.b16 %v1089
  %v1158 = vunpack.c.l.b16 %v1090
  %v1159 = vunpack.c.l.b16 %v1091
  %v1160 = vunpack.c.l.b16 %v1092
  %v1161 = vunpack.c.l.b16 %v1093
  %v1162 = vunpack.c.l.b16 %v1094
  %v1163 = vunpack.c.l.b16 %v1095
  %v1164 = vunpack.c.l.b16 %v1096
  %v1165 = vunpack.c.l.b16 %v1097
  %v1166 = vunpack.c.l.b16 %v1098
  %v1167 = vunpack.c.l.b16 %v1099
  %v1168 = vunpack.c.l.b16 %v1100
  %v1169 = vunpack.c.l.b16 %v1101
  %v1170 = vunpack.c.l.b16 %v1102
  %v1171 = vunpack.c.l.b16 %v1103
  %v1172 = vunpack.c.l.b16 %v1104
  %v1173 = vunpack.c.l.b16 %v1105
  %v1174 = vunpack.c.l.b16 %v1106
  %v1175 = vunpack.c.l.b16 %v1107
  %v1176 = vunpack.c.l.b16 %v1108
  %v1177 = vunpack.c.l.b16 %v1109
  %v1178 = vpack.c.b16 %v1147, %v1146
  %v1179 = vpack.c.b16 %v1149, %v1148
  %v1180 = vpack.c.b16 %v1151, %v1150
  %v1181 = vpack.c.b16 %v1153, %v1152
  %v1182 = vpack.c.b16 %v1155, %v1154
  %v1183 = vpack.c.b16 %v1157, %v1156
  %v1184 = vpack.c.b16 %v1159, %v1158
  %v1185 = vpack.c.b16 %v1161, %v1160
  %v1186 = vpack.c.b16 %v1163, %v1162
  %v1187 = vpack.c.b16 %v1165, %v1164
  %v1188 = vpack.c.b16 %v1167, %v1166
  %v1189 = vpack.c.b16 %v1169, %v1168
  %v1190 = vpack.c.b16 %v1171, %v1170
  %v1191 = vpack.c.b16 %v1173, %v1172
  %v1192 = vpack.c.b16 %v1175, %v1174
  %v1193 = vpack.c.b16 %v1177, %v1176
  %1210 = vmatpush.bf16.msra.mxu0 %v1185
  %1211 = vmatpush.bf16.msra.mxu0 %v1184
  %1212 = vmatpush.bf16.msra.mxu0 %v1183
  %1213 = vmatpush.bf16.msra.mxu0 %v1182
  %1214 = vmatpush.bf16.msra.mxu0 %v1181
  %1215 = vmatpush.bf16.msra.mxu0 %v1180
  %1216 = vmatpush.bf16.msra.mxu0 %v1179
  %1217 = vmatpush.bf16.msra.mxu0 %v1178
  %1218 = vmatmul.bf16.gmra.mxu0 %v1046
  %v1219 = vpop.f32.mrf.mxu0
  %v1220 = vadd.f32 %v1112, %v1219
  %v1221 = vpop.f32.mrf.mxu0
  %v1222 = vadd.f32 %v1112, %v1221
  %1223 = vmatmul.bf16.gmra.mxu0 %v1048
  %v1224 = vpop.f32.mrf.mxu0
  %v1225 = vadd.f32 %v1112, %v1224
  %v1226 = vpop.f32.mrf.mxu0
  %v1227 = vadd.f32 %v1112, %v1226
  %1228 = vmatmul.bf16.gmra.mxu0 %v1050
  %v1229 = vpop.f32.mrf.mxu0
  %v1230 = vadd.f32 %v1112, %v1229
  %v1231 = vpop.f32.mrf.mxu0
  %v1232 = vadd.f32 %v1112, %v1231
  %1233 = vmatmul.bf16.gmra.mxu0 %v1052
  %v1234 = vpop.f32.mrf.mxu0
  %v1235 = vadd.f32 %v1112, %v1234
  %v1236 = vpop.f32.mrf.mxu0
  %v1237 = vadd.f32 %v1112, %v1236
  %1238 = vmatmul.bf16.gmra.mxu0 %v1054
  %v1239 = vpop.f32.mrf.mxu0
  %v1240 = vadd.f32 %v1112, %v1239
  %v1241 = vpop.f32.mrf.mxu0
  %v1242 = vadd.f32 %v1112, %v1241
  %1243 = vmatmul.bf16.gmra.mxu0 %v1056
  %v1244 = vpop.f32.mrf.mxu0
  %v1245 = vadd.f32 %v1112, %v1244
  %v1246 = vpop.f32.mrf.mxu0
  %v1247 = vadd.f32 %v1112, %v1246
  %1248 = vmatmul.bf16.gmra.mxu0 %v1058
  %v1249 = vpop.f32.mrf.mxu0
  %v1250 = vadd.f32 %v1112, %v1249
  %v1251 = vpop.f32.mrf.mxu0
  %v1252 = vadd.f32 %v1112, %v1251
  %1253 = vmatmul.bf16.gmra.mxu0 %v1060
  %v1254 = vpop.f32.mrf.mxu0
  %v1255 = vadd.f32 %v1112, %v1254
  %v1256 = vpop.f32.mrf.mxu0
  %v1257 = vadd.f32 %v1112, %v1256
  %1258 = vmatmul.bf16.gmra.mxu0 %v1062
  %v1259 = vpop.f32.mrf.mxu0
  %v1260 = vadd.f32 %v1112, %v1259
  %v1261 = vpop.f32.mrf.mxu0
  %v1262 = vadd.f32 %v1112, %v1261
  %1263 = vmatmul.bf16.gmra.mxu0 %v1064
  %v1264 = vpop.f32.mrf.mxu0
  %v1265 = vadd.f32 %v1112, %v1264
  %v1266 = vpop.f32.mrf.mxu0
  %v1267 = vadd.f32 %v1112, %v1266
  %1268 = vmatmul.bf16.gmra.mxu0 %v1066
  %v1269 = vpop.f32.mrf.mxu0
  %v1270 = vadd.f32 %v1112, %v1269
  %v1271 = vpop.f32.mrf.mxu0
  %v1272 = vadd.f32 %v1112, %v1271
  %1273 = vmatmul.bf16.gmra.mxu0 %v1068
  %v1274 = vpop.f32.mrf.mxu0
  %v1275 = vadd.f32 %v1112, %v1274
  %v1276 = vpop.f32.mrf.mxu0
  %v1277 = vadd.f32 %v1112, %v1276
  %1278 = vmatmul.bf16.gmra.mxu0 %v1070
  %v1279 = vpop.f32.mrf.mxu0
  %v1280 = vadd.f32 %v1112, %v1279
  %v1281 = vpop.f32.mrf.mxu0
  %v1282 = vadd.f32 %v1112, %v1281
  %1283 = vmatmul.bf16.gmra.mxu0 %v1072
  %v1284 = vpop.f32.mrf.mxu0
  %v1285 = vadd.f32 %v1112, %v1284
  %v1286 = vpop.f32.mrf.mxu0
  %v1287 = vadd.f32 %v1112, %v1286
  %1288 = vmatmul.bf16.gmra.mxu0 %v1074
  %v1289 = vpop.f32.mrf.mxu0
  %v1290 = vadd.f32 %v1112, %v1289
  %v1291 = vpop.f32.mrf.mxu0
  %v1292 = vadd.f32 %v1112, %v1291
  %1293 = vmatmul.bf16.gmra.mxu0 %v1076
  %v1294 = vpop.f32.mrf.mxu0
  %v1295 = vadd.f32 %v1112, %v1294
  %v1296 = vpop.f32.mrf.mxu0
  %v1297 = vadd.f32 %v1112, %v1296
  %1298 = vdwg.mxu0
  %1299 = vmatpush.bf16.msra.mxu0 %v1193
  %1300 = vmatpush.bf16.msra.mxu0 %v1192
  %1301 = vmatpush.bf16.msra.mxu0 %v1191
  %1302 = vmatpush.bf16.msra.mxu0 %v1190
  %1303 = vmatpush.bf16.msra.mxu0 %v1189
  %1304 = vmatpush.bf16.msra.mxu0 %v1188
  %1305 = vmatpush.bf16.msra.mxu0 %v1187
  %1306 = vmatpush.bf16.msra.mxu0 %v1186
  %1307 = vmatmul.bf16.gmra.mxu0 %v1047
  %v1308 = vpop.f32.mrf.mxu0
  %v1309 = vadd.f32 %v1220, %v1308
  %v1310 = vpop.f32.mrf.mxu0
  %v1311 = vadd.f32 %v1222, %v1310
  %1312 = vmatmul.bf16.gmra.mxu0 %v1049
  %v1313 = vpop.f32.mrf.mxu0
  %v1314 = vadd.f32 %v1225, %v1313
  %v1315 = vpop.f32.mrf.mxu0
  %v1316 = vadd.f32 %v1227, %v1315
  %1317 = vmatmul.bf16.gmra.mxu0 %v1051
  %v1318 = vpop.f32.mrf.mxu0
  %v1319 = vadd.f32 %v1230, %v1318
  %v1320 = vpop.f32.mrf.mxu0
  %v1321 = vadd.f32 %v1232, %v1320
  %1322 = vmatmul.bf16.gmra.mxu0 %v1053
  %v1323 = vpop.f32.mrf.mxu0
  %v1324 = vadd.f32 %v1235, %v1323
  %v1325 = vpop.f32.mrf.mxu0
  %v1326 = vadd.f32 %v1237, %v1325
  %1327 = vmatmul.bf16.gmra.mxu0 %v1055
  %v1328 = vpop.f32.mrf.mxu0
  %v1329 = vadd.f32 %v1240, %v1328
  %v1330 = vpop.f32.mrf.mxu0
  %v1331 = vadd.f32 %v1242, %v1330
  %1332 = vmatmul.bf16.gmra.mxu0 %v1057
  %v1333 = vpop.f32.mrf.mxu0
  %v1334 = vadd.f32 %v1245, %v1333
  %v1335 = vpop.f32.mrf.mxu0
  %v1336 = vadd.f32 %v1247, %v1335
  %1337 = vmatmul.bf16.gmra.mxu0 %v1059
  %v1338 = vpop.f32.mrf.mxu0
  %v1339 = vadd.f32 %v1250, %v1338
  %v1340 = vpop.f32.mrf.mxu0
  %v1341 = vadd.f32 %v1252, %v1340
  %1342 = vmatmul.bf16.gmra.mxu0 %v1061
  %v1343 = vpop.f32.mrf.mxu0
  %v1344 = vadd.f32 %v1255, %v1343
  %v1345 = vpop.f32.mrf.mxu0
  %v1346 = vadd.f32 %v1257, %v1345
  %1347 = vmatmul.bf16.gmra.mxu0 %v1063
  %v1348 = vpop.f32.mrf.mxu0
  %v1349 = vadd.f32 %v1260, %v1348
  %v1350 = vpop.f32.mrf.mxu0
  %v1351 = vadd.f32 %v1262, %v1350
  %1352 = vmatmul.bf16.gmra.mxu0 %v1065
  %v1353 = vpop.f32.mrf.mxu0
  %v1354 = vadd.f32 %v1265, %v1353
  %v1355 = vpop.f32.mrf.mxu0
  %v1356 = vadd.f32 %v1267, %v1355
  %1357 = vmatmul.bf16.gmra.mxu0 %v1067
  %v1358 = vpop.f32.mrf.mxu0
  %v1359 = vadd.f32 %v1270, %v1358
  %v1360 = vpop.f32.mrf.mxu0
  %v1361 = vadd.f32 %v1272, %v1360
  %1362 = vmatmul.bf16.gmra.mxu0 %v1069
  %v1363 = vpop.f32.mrf.mxu0
  %v1364 = vadd.f32 %v1275, %v1363
  %v1365 = vpop.f32.mrf.mxu0
  %v1366 = vadd.f32 %v1277, %v1365
  %1367 = vmatmul.bf16.gmra.mxu0 %v1071
  %v1368 = vpop.f32.mrf.mxu0
  %v1369 = vadd.f32 %v1280, %v1368
  %v1370 = vpop.f32.mrf.mxu0
  %v1371 = vadd.f32 %v1282, %v1370
  %1372 = vmatmul.bf16.gmra.mxu0 %v1073
  %v1373 = vpop.f32.mrf.mxu0
  %v1374 = vadd.f32 %v1285, %v1373
  %v1375 = vpop.f32.mrf.mxu0
  %v1376 = vadd.f32 %v1287, %v1375
  %1377 = vmatmul.bf16.gmra.mxu0 %v1075
  %v1378 = vpop.f32.mrf.mxu0
  %v1379 = vadd.f32 %v1290, %v1378
  %v1380 = vpop.f32.mrf.mxu0
  %v1381 = vadd.f32 %v1292, %v1380
  %1382 = vmatmul.bf16.gmra.mxu0 %v1077
  %v1383 = vpop.f32.mrf.mxu0
  %v1384 = vadd.f32 %v1295, %v1383
  %v1385 = vpop.f32.mrf.mxu0
  %v1386 = vadd.f32 %v1297, %v1385
  %1387 = vdwg.mxu0
  %vm1388 = vcmask 64512
  %1389 = vst.msk [vmem:[%s7] sm:$0xff] %vm1388, %v1309
  %1390 = vst.msk [vmem:[%s7 + $0x8] sm:$0xff] %vm1388, %v1311
  %1391 = vst.msk [vmem:[%s7 + $0x10] sm:$0xff] %vm1388, %v1314
  %1392 = vst.msk [vmem:[%s7 + $0x18] sm:$0xff] %vm1388, %v1316
  %1393 = vst.msk [vmem:[%s7 + $0x20] sm:$0xff] %vm1388, %v1319
  %1394 = vst.msk [vmem:[%s7 + $0x28] sm:$0xff] %vm1388, %v1321
  %1395 = vst.msk [vmem:[%s7 + $0x30] sm:$0xff] %vm1388, %v1324
  %1396 = vst.msk [vmem:[%s7 + $0x38] sm:$0xff] %vm1388, %v1326
  %1397 = vst.msk [vmem:[%s7 + $0x40] sm:$0xff] %vm1388, %v1329
  %1398 = vst.msk [vmem:[%s7 + $0x48] sm:$0xff] %vm1388, %v1331
  %1399 = vst.msk [vmem:[%s7 + $0x50] sm:$0xff] %vm1388, %v1334
  %1400 = vst.msk [vmem:[%s7 + $0x58] sm:$0xff] %vm1388, %v1336
  %1401 = vst.msk [vmem:[%s7 + $0x60] sm:$0xff] %vm1388, %v1339
  %1402 = vst.msk [vmem:[%s7 + $0x68] sm:$0xff] %vm1388, %v1341
  %1403 = vst.msk [vmem:[%s7 + $0x70] sm:$0xff] %vm1388, %v1344
  %1404 = vst.msk [vmem:[%s7 + $0x78] sm:$0xff] %vm1388, %v1346
  %1405 = vst.msk [vmem:[%s7 + $0x80] sm:$0xff] %vm1388, %v1349
  %1406 = vst.msk [vmem:[%s7 + $0x88] sm:$0xff] %vm1388, %v1351
  %1407 = vst.msk [vmem:[%s7 + $0x90] sm:$0xff] %vm1388, %v1354
  %1408 = vst.msk [vmem:[%s7 + $0x98] sm:$0xff] %vm1388, %v1356
  %1409 = vst.msk [vmem:[%s7 + $0xa0] sm:$0xff] %vm1388, %v1359
  %1410 = vst.msk [vmem:[%s7 + $0xa8] sm:$0xff] %vm1388, %v1361
  %1411 = vst.msk [vmem:[%s7 + $0xb0] sm:$0xff] %vm1388, %v1364
  %1412 = vst.msk [vmem:[%s7 + $0xb8] sm:$0xff] %vm1388, %v1366
  %1413 = vst.msk [vmem:[%s7 + $0xc0] sm:$0xff] %vm1388, %v1369
  %1414 = vst.msk [vmem:[%s7 + $0xc8] sm:$0xff] %vm1388, %v1371
  %1415 = vst.msk [vmem:[%s7 + $0xd0] sm:$0xff] %vm1388, %v1374
  %1416 = vst.msk [vmem:[%s7 + $0xd8] sm:$0xff] %vm1388, %v1376
  %1417 = vst.msk [vmem:[%s7 + $0xe0] sm:$0xff] %vm1388, %v1379
  %1418 = vst.msk [vmem:[%s7 + $0xe8] sm:$0xff] %vm1388, %v1381
  %1419 = vst.msk [vmem:[%s7 + $0xf0] sm:$0xff] %vm1388, %v1384
  %1420 = vst.msk [vmem:[%s7 + $0xf8] sm:$0xff] %vm1388, %v1386
  // Predicated region
  $region30: #{tpu_custom_call.1} parent=0 // pred_check
    _
  $region31: #{tpu_custom_call.1} parent=0 // pred_check_branch
    %1422 = sbr.rel (0) target = $region33
  $region32: #{tpu_custom_call.1} parent=0 // pred_region
    _
  $region33: #{tpu_custom_call.1} parent=0 // pred_fallthru
    _
  // Predicated region
  $region34: #{tpu_custom_call.1} parent=0 // pred_check
    _
  $region35: #{tpu_custom_call.1} parent=0 // pred_check_branch
    %1424 = sbr.rel (0) target = $region37
  $region36: #{tpu_custom_call.1} parent=0 // pred_region
    _
  $region37: #{tpu_custom_call.1} parent=0 // pred_fallthru
    _

</llo_original>
